<compile_context>
chip_gen: v5e
topology: v5e:2x2
jax: 0.10.0
libtpu: 0.0.40
codegen_flags: <defaults>
</compile_context>

<pallas_src>
import jax
import jax.numpy as jnp
from jax import lax
from jax.experimental import pallas as pl
from jax.experimental.pallas import tpu as pltpu

IN_DIM = 512
LATENT_DIM = 16
CHUNK = 512  # sub-chunk rows for encoder/decoder dot interleaving


def _round_up(n, m):
    return ((n + m - 1) // m) * m


def _cdiv(a, b):
    return (a + b - 1) // b


def _encdec_kernel(x_ref, enc_ref, dec_ref, xe_ref, y_ref):
    # x: (tm, 512)   enc: (512, 16)   dec: (16, 512)   (weights VMEM-resident)
    enc = enc_ref[...]
    dec = dec_ref[...]
    tm = x_ref.shape[0]
    chunk = CHUNK if (tm % CHUNK == 0) else tm
    n_chunks = tm // chunk

    def body(c, carry):
        r = c * chunk
        if not isinstance(r, int):
            r = pl.multiple_of(r, chunk)
        # Encoder dot with f32 MXU accumulation; result kept in temporaries
        # (no full-tile scratch -> decoder dot of chunk i can start while the
        # encoder dot of chunk i+1 is pushed).
        xe_c = jnp.dot(x_ref[pl.ds(r, chunk), :], enc,
                       preferred_element_type=jnp.float32)
        xe_ref[pl.ds(r, chunk), :] = xe_c.astype(xe_ref.dtype)
        # Cast intermediate back to the weight dtype so bf16/fp8 inputs keep
        # narrow MXU operands instead of silently promoting dec to f32.
        y_c = jnp.dot(xe_c.astype(dec.dtype), dec,
                      preferred_element_type=jnp.float32)
        y_ref[pl.ds(r, chunk), :] = y_c.astype(y_ref.dtype)
        return carry

    # Unrolled: gives the LLO scheduler visibility to interleave the chunks.
    lax.fori_loop(0, n_chunks, body, 0, unroll=True)


def _vmem_capacity_bytes():
    # Best-effort VMEM capacity query; default conservatively to 64 MiB (v7x).
    try:
        info = pltpu.get_tpu_info()
        cap = int(getattr(info, "vmem_capacity_bytes", 0))
        if cap > 0:
            return cap
    except Exception:
        pass
    try:
        kind = jax.devices()[0].device_kind.lower()
        if any(tag in kind for tag in ("v4", "v5", "v6")):
            return 128 << 20
    except Exception:
        pass
    return 64 << 20


def encoder_decoder_forward(x, encoder, decoder, *, tm_max=None):
    B = x.shape[0]
    dtype = x.dtype
    itemsize = jnp.dtype(dtype).itemsize
    row_align = 16 if itemsize < 4 else 8

    vmem_cap = _vmem_capacity_bytes()
    big_vmem = vmem_cap >= (100 << 20)
    if tm_max is None:
        tm_max = 4096 if big_vmem else 2048  # v4/v5e/v6e vs v7x

    # Row tile: as large as allowed; CHUNK-aligned when multi-chunk; split into
    # >=2 grid steps when the batch allows it (megacore on v7x, cheap elsewhere).
    if B <= CHUNK:
        tm = _round_up(max(1, min(B, tm_max)), row_align)
    else:
        tm = min(tm_max, _round_up(_cdiv(B, 2), CHUNK))
        tm = max(tm, CHUNK)
    tm = _round_up(tm, row_align)

    # Pad batch to a multiple of tm so the grid tiles exactly; slice afterwards.
    B_pad = _round_up(B, tm)
    if B_pad != B:
        x = jnp.pad(x, ((0, B_pad - B), (0, 0)))
    grid = (B_pad // tm,)

    # VMEM budget: double-buffered x/y/xe tiles + resident weights + headroom;
    # clamp per chip generation (leave headroom below v7x's 64 MiB physical VMEM).
    per_step = 2 * tm * (2 * IN_DIM + LATENT_DIM) * itemsize
    weight_bytes = 2 * IN_DIM * LATENT_DIM * itemsize
    vmem_limit = int((per_step + 2 * weight_bytes) * 1.5) + (4 << 20)
    vmem_limit = max(vmem_limit, 32 << 20)
    vmem_limit = min(vmem_limit, (112 << 20) if big_vmem else (48 << 20))

    flops = 2 * 2 * B_pad * IN_DIM * LATENT_DIM  # two matmuls
    bytes_accessed = B_pad * (2 * IN_DIM + LATENT_DIM) * itemsize + weight_bytes

    fn = pl.pallas_call(
        _encdec_kernel,
        out_shape=(jax.ShapeDtypeStruct((B_pad, LATENT_DIM), dtype),
                   jax.ShapeDtypeStruct((B_pad, IN_DIM), dtype)),
        grid_spec=pltpu.PrefetchScalarGridSpec(
            num_scalar_prefetch=0,
            grid=grid,
            in_specs=[
                pl.BlockSpec((tm, IN_DIM), lambda i: (i, 0)),           # x tile
                pl.BlockSpec((IN_DIM, LATENT_DIM), lambda i: (0, 0)),   # encoder (resident)
                pl.BlockSpec((LATENT_DIM, IN_DIM), lambda i: (0, 0)),   # decoder (resident)
            ],
            out_specs=(
                pl.BlockSpec((tm, LATENT_DIM), lambda i: (i, 0)),       # xe tile
                pl.BlockSpec((tm, IN_DIM), lambda i: (i, 0)),           # y tile
            ),
        ),
        compiler_params=pltpu.CompilerParams(
            dimension_semantics=("parallel",),   # megacore sharding on v7x
            vmem_limit_bytes=vmem_limit,
        ),
        cost_estimate=pl.CostEstimate(
            flops=flops, transcendentals=0, bytes_accessed=bytes_accessed),
    )
    xe, y = fn(x, encoder, decoder)
    if B_pad != B:
        xe = xe[:B]
        y = y[:B]
    return xe, y


if __name__ == "__main__":
    key = jax.random.PRNGKey(0)
    k_x, k_enc, k_dec = jax.random.split(key, 3)

    # Small, deterministic shapes consistent with the module (512 -> 16 -> 512).
    # B=20 deliberately not a multiple of the tile to exercise padding.
    B = 20
    x = jax.random.normal(k_x, (B, IN_DIM), dtype=jnp.float32)
    encoder = jax.random.normal(k_enc, (IN_DIM, LATENT_DIM), dtype=jnp.float32)
    decoder = jax.random.normal(k_dec, (LATENT_DIM, IN_DIM), dtype=jnp.float32)

    # Reference (plain JAX).
    xe_ref = x @ encoder
    y_ref = xe_ref @ decoder

    # 1) Default tile (single grid step at this tiny batch).
    xe, y = encoder_decoder_forward(x, encoder, decoder)
    jax.block_until_ready((xe, y))
    assert xe.shape == (B, LATENT_DIM) and y.shape == (B, IN_DIM)
    assert jnp.allclose(xe, xe_ref, atol=1e-4, rtol=1e-4)
    assert jnp.allclose(y, y_ref, atol=1e-3, rtol=1e-3)

    # 2) Tiny tile to exercise the multi-step grid + host padding path.
    xe2, y2 = encoder_decoder_forward(x, encoder, decoder, tm_max=8)
    jax.block_until_ready((xe2, y2))
    assert jnp.allclose(xe2, xe_ref, atol=1e-4, rtol=1e-4)
    assert jnp.allclose(y2, y_ref, atol=1e-3, rtol=1e-3)

    print("KERNEL_OK")
</pallas_src>

<mosaic_0001>
module attributes {stable_mosaic.version = 11 : i64} {
  func.func @_encdec_kernel(%arg0: i32, %arg1: memref<24x512xf32, #tpu.memory_space<vmem>>, %arg2: memref<512x16xf32, #tpu.memory_space<vmem>>, %arg3: memref<16x512xf32, #tpu.memory_space<vmem>>, %arg4: memref<24x16xf32, #tpu.memory_space<vmem>>, %arg5: memref<24x512xf32, #tpu.memory_space<vmem>>) attributes {dimension_semantics = [#tpu.dimension_semantics<parallel>], iteration_bounds = array<i64: 1>, scalar_prefetch = 0 : i64, scratch_operands = 0 : i64, tpu.core_type = #tpu.core_type<tc>, window_params = [{transform_indices = @transform_0, window_bounds = array<i64: 24, 512>}, {pipeline_mode = #tpu.pipeline_mode<synchronous>, transform_indices = @transform_1, window_bounds = array<i64: 512, 16>}, {pipeline_mode = #tpu.pipeline_mode<synchronous>, transform_indices = @transform_2, window_bounds = array<i64: 16, 512>}, {transform_indices = @transform_3, window_bounds = array<i64: 24, 16>}, {transform_indices = @transform_4, window_bounds = array<i64: 24, 512>}]} {
    %c0 = arith.constant 0 : index
    %c0_0 = arith.constant 0 : index
    %0 = vector.load %arg2[%c0, %c0_0] : memref<512x16xf32, #tpu.memory_space<vmem>>, vector<512x16xf32>
    %c0_1 = arith.constant 0 : index
    %c0_2 = arith.constant 0 : index
    %1 = vector.load %arg3[%c0_1, %c0_2] : memref<16x512xf32, #tpu.memory_space<vmem>>, vector<16x512xf32>
    %c0_i32 = arith.constant 0 : i32
    %c24_i32 = arith.constant 24 : i32
    %2 = arith.muli %c0_i32, %c24_i32 : i32
    %3 = tpu.assume_multiple %2, 24 : i32
    %4 = arith.index_cast %3 : i32 to index
    %c0_3 = arith.constant 0 : index
    %5 = vector.load %arg1[%4, %c0_3] : memref<24x512xf32, #tpu.memory_space<vmem>>, vector<24x512xf32>
    %cst = arith.constant dense<0.000000e+00> : vector<24x16xf32>
    %6 = tpu.matmul %5, %0, %cst {dimension_numbers = #tpu.dot_dimension_numbers<[1], [0], [0], [1], [0, 0, 1, 1], [], []>} : vector<24x512xf32>, vector<512x16xf32>, vector<24x16xf32> -> vector<24x16xf32>
    %7 = arith.index_cast %3 : i32 to index
    %c0_4 = arith.constant 0 : index
    %8 = vector.load %arg4[%7, %c0_4] : memref<24x16xf32, #tpu.memory_space<vmem>>, vector<24x16xf32>
    tpu.vector_store %arg4[%7, %c0_4], %6 {strides = array<i32>} : memref<24x16xf32, #tpu.memory_space<vmem>>, vector<24x16xf32>,
    %cst_5 = arith.constant dense<0.000000e+00> : vector<24x512xf32>
    %9 = tpu.matmul %6, %1, %cst_5 {dimension_numbers = #tpu.dot_dimension_numbers<[1], [0], [0], [1], [0, 0, 1, 1], [], []>} : vector<24x16xf32>, vector<16x512xf32>, vector<24x512xf32> -> vector<24x512xf32>
    %10 = arith.index_cast %3 : i32 to index
    %c0_6 = arith.constant 0 : index
    %11 = vector.load %arg5[%10, %c0_6] : memref<24x512xf32, #tpu.memory_space<vmem>>, vector<24x512xf32>
    tpu.vector_store %arg5[%10, %c0_6], %9 {strides = array<i32>} : memref<24x512xf32, #tpu.memory_space<vmem>>, vector<24x512xf32>,
    %c1_i32 = arith.constant 1 : i32
    return
  }
  func.func @transform_0(%arg0: i32) -> (i32, i32) {
    %c0_i32 = arith.constant 0 : i32
    %c0_i32_0 = arith.constant 0 : i32
    return %arg0, %c0_i32 : i32, i32
  }
  func.func @transform_1(%arg0: i32) -> (i32, i32) {
    %c0_i32 = arith.constant 0 : i32
    %c0_i32_0 = arith.constant 0 : i32
    %c0_i32_1 = arith.constant 0 : i32
    return %c0_i32, %c0_i32_0 : i32, i32
  }
  func.func @transform_2(%arg0: i32) -> (i32, i32) {
    %c0_i32 = arith.constant 0 : i32
    %c0_i32_0 = arith.constant 0 : i32
    %c0_i32_1 = arith.constant 0 : i32
    return %c0_i32, %c0_i32_0 : i32, i32
  }
  func.func @transform_3(%arg0: i32) -> (i32, i32) {
    %c0_i32 = arith.constant 0 : i32
    %c0_i32_0 = arith.constant 0 : i32
    return %arg0, %c0_i32 : i32, i32
  }
  func.func @transform_4(%arg0: i32) -> (i32, i32) {
    %c0_i32 = arith.constant 0 : i32
    %c0_i32_0 = arith.constant 0 : i32
    return %arg0, %c0_i32 : i32, i32
  }
}

</mosaic_0001>

<llo_original>
// kernel: tpu_custom_call.1
$region0: #{tpu_custom_call.1}
  #allocation0 [shape = 'u32[]', space=smem, size = 0x4, offset = 0x4, fixed_abs, tag = 'smem constant byte address 0x4 - core index']
  #allocation1 [shape = 'u32[72,128]{1,0:T(1,128)}', space=vmem, size = 0x9000, scoped, tag = 'internal scratch']
  %s0 = inlined_call_operand.vmem [shape: f32[24,512], index: 0, kind: input, shape index: {}]
  %s1 = inlined_call_operand.vmem [shape: f32[512,16], index: 1, kind: input, shape index: {}]
  %s2 = inlined_call_operand.vmem [shape: f32[16,512], index: 2, kind: input, shape index: {}]
  %s3 = inlined_call_operand.vmem [shape: f32[24,16], index: 3, kind: output, shape index: {0}]
  %s4 = inlined_call_operand.hbm [shape: f32[24,512], index: 4, kind: output, shape index: {1}]
  %5 = xla_tuple %s3, %s4
  %s6 = sld [smem:[#allocation0]]
  $region30: #{tpu_custom_call.1} parent=0
    _
  %s8 = ssub.s32 1, %s6
  %s9 = scalar_select 0, %s8, %s6
  $region1: #{tpu_custom_call.1} parent=0
    #allocation2 [shape = 'u8[49152]{0}', space=vmem, size = 0xc000, scoped, tag = 'output window, operand 1, single buffered']
    #allocation3 [shape = 's32[1]{0}', space=sflag, size = 0x4, scoped, tag = 'scoped memory for tpu_custom_call.1']
    %10 = vsyncpa [#allocation3], 0
    // Predicated region
    $region2: #{tpu_custom_call.1} parent=1 // pred_check
      _
    $region3: #{tpu_custom_call.1} parent=1 // pred_check_branch
      %12 = sbr.rel (0) target = $region5
    $region4: #{tpu_custom_call.1} parent=1 // pred_region
      _
    $region5: #{tpu_custom_call.1} parent=1 // pred_fallthru
      _
    // Predicated region
    $region6: #{tpu_custom_call.1} parent=1 // pred_check
      _
    $region7: #{tpu_custom_call.1} parent=1 // pred_check_branch
      %14 = sbr.rel (0) target = $region9
    $region8: #{tpu_custom_call.1} parent=1 // pred_region
      _
    $region9: #{tpu_custom_call.1} parent=1 // pred_fallthru
      _
    // Predicated region
    $region10: #{tpu_custom_call.1} parent=1 // pred_check
      _
    $region11: #{tpu_custom_call.1} parent=1 // pred_check_branch
      %16 = sbr.rel (0) target = $region13
    $region12: #{tpu_custom_call.1} parent=1 // pred_region
      _
    $region13: #{tpu_custom_call.1} parent=1 // pred_fallthru
      _
    %v17 = vld [vmem:[%s1] sm:$0xff]
    %v18 = vld [vmem:[%s1 + $0x8] sm:$0xff]
    %v19 = vld [vmem:[%s1 + $0x10] sm:$0xff]
    %v20 = vld [vmem:[%s1 + $0x18] sm:$0xff]
    %v21 = vld [vmem:[%s1 + $0x20] sm:$0xff]
    %v22 = vld [vmem:[%s1 + $0x28] sm:$0xff]
    %v23 = vld [vmem:[%s1 + $0x30] sm:$0xff]
    %v24 = vld [vmem:[%s1 + $0x38] sm:$0xff]
    %v25 = vld [vmem:[%s1 + $0x40] sm:$0xff]
    %v26 = vld [vmem:[%s1 + $0x48] sm:$0xff]
    %v27 = vld [vmem:[%s1 + $0x50] sm:$0xff]
    %v28 = vld [vmem:[%s1 + $0x58] sm:$0xff]
    %v29 = vld [vmem:[%s1 + $0x60] sm:$0xff]
    %v30 = vld [vmem:[%s1 + $0x68] sm:$0xff]
    %v31 = vld [vmem:[%s1 + $0x70] sm:$0xff]
    %v32 = vld [vmem:[%s1 + $0x78] sm:$0xff]
    %v33 = vld [vmem:[%s1 + $0x80] sm:$0xff]
    %v34 = vld [vmem:[%s1 + $0x88] sm:$0xff]
    %v35 = vld [vmem:[%s1 + $0x90] sm:$0xff]
    %v36 = vld [vmem:[%s1 + $0x98] sm:$0xff]
    %v37 = vld [vmem:[%s1 + $0xa0] sm:$0xff]
    %v38 = vld [vmem:[%s1 + $0xa8] sm:$0xff]
    %v39 = vld [vmem:[%s1 + $0xb0] sm:$0xff]
    %v40 = vld [vmem:[%s1 + $0xb8] sm:$0xff]
    %v41 = vld [vmem:[%s1 + $0xc0] sm:$0xff]
    %v42 = vld [vmem:[%s1 + $0xc8] sm:$0xff]
    %v43 = vld [vmem:[%s1 + $0xd0] sm:$0xff]
    %v44 = vld [vmem:[%s1 + $0xd8] sm:$0xff]
    %v45 = vld [vmem:[%s1 + $0xe0] sm:$0xff]
    %v46 = vld [vmem:[%s1 + $0xe8] sm:$0xff]
    %v47 = vld [vmem:[%s1 + $0xf0] sm:$0xff]
    %v48 = vld [vmem:[%s1 + $0xf8] sm:$0xff]
    %v49 = vld [vmem:[%s1 + $0x100] sm:$0xff]
    %v50 = vld [vmem:[%s1 + $0x108] sm:$0xff]
    %v51 = vld [vmem:[%s1 + $0x110] sm:$0xff]
    %v52 = vld [vmem:[%s1 + $0x118] sm:$0xff]
    %v53 = vld [vmem:[%s1 + $0x120] sm:$0xff]
    %v54 = vld [vmem:[%s1 + $0x128] sm:$0xff]
    %v55 = vld [vmem:[%s1 + $0x130] sm:$0xff]
    %v56 = vld [vmem:[%s1 + $0x138] sm:$0xff]
    %v57 = vld [vmem:[%s1 + $0x140] sm:$0xff]
    %v58 = vld [vmem:[%s1 + $0x148] sm:$0xff]
    %v59 = vld [vmem:[%s1 + $0x150] sm:$0xff]
    %v60 = vld [vmem:[%s1 + $0x158] sm:$0xff]
    %v61 = vld [vmem:[%s1 + $0x160] sm:$0xff]
    %v62 = vld [vmem:[%s1 + $0x168] sm:$0xff]
    %v63 = vld [vmem:[%s1 + $0x170] sm:$0xff]
    %v64 = vld [vmem:[%s1 + $0x178] sm:$0xff]
    %v65 = vld [vmem:[%s1 + $0x180] sm:$0xff]
    %v66 = vld [vmem:[%s1 + $0x188] sm:$0xff]
    %v67 = vld [vmem:[%s1 + $0x190] sm:$0xff]
    %v68 = vld [vmem:[%s1 + $0x198] sm:$0xff]
    %v69 = vld [vmem:[%s1 + $0x1a0] sm:$0xff]
    %v70 = vld [vmem:[%s1 + $0x1a8] sm:$0xff]
    %v71 = vld [vmem:[%s1 + $0x1b0] sm:$0xff]
    %v72 = vld [vmem:[%s1 + $0x1b8] sm:$0xff]
    %v73 = vld [vmem:[%s1 + $0x1c0] sm:$0xff]
    %v74 = vld [vmem:[%s1 + $0x1c8] sm:$0xff]
    %v75 = vld [vmem:[%s1 + $0x1d0] sm:$0xff]
    %v76 = vld [vmem:[%s1 + $0x1d8] sm:$0xff]
    %v77 = vld [vmem:[%s1 + $0x1e0] sm:$0xff]
    %v78 = vld [vmem:[%s1 + $0x1e8] sm:$0xff]
    %v79 = vld [vmem:[%s1 + $0x1f0] sm:$0xff]
    %v80 = vld [vmem:[%s1 + $0x1f8] sm:$0xff]
    %v81 = vld [vmem:[%s2] sm:$0xff]
    %v82 = vld [vmem:[%s2 + $0x8] sm:$0xff]
    %v83 = vld [vmem:[%s2 + $0x10] sm:$0xff]
    %v84 = vld [vmem:[%s2 + $0x18] sm:$0xff]
    %v85 = vld [vmem:[%s2 + $0x20] sm:$0xff]
    %v86 = vld [vmem:[%s2 + $0x28] sm:$0xff]
    %v87 = vld [vmem:[%s2 + $0x30] sm:$0xff]
    %v88 = vld [vmem:[%s2 + $0x38] sm:$0xff]
    %s89 = smul.u32 0, 4
    %s90 = smul.addr %s89, 8
    %s91 = scalar_lea.vmem %s0, %s90
    %v92 = vld [vmem:[%s91] sm:$0xff]
    %v93 = vld [vmem:[%s91 + $0x8] sm:$0xff]
    %v94 = vld [vmem:[%s91 + $0x10] sm:$0xff]
    %v95 = vld [vmem:[%s91 + $0x18] sm:$0xff]
    %v96 = vld [vmem:[%s91 + $0x20] sm:$0xff]
    %v97 = vld [vmem:[%s91 + $0x28] sm:$0xff]
    %v98 = vld [vmem:[%s91 + $0x30] sm:$0xff]
    %v99 = vld [vmem:[%s91 + $0x38] sm:$0xff]
    %v100 = vld [vmem:[%s91 + $0x40] sm:$0xff]
    %v101 = vld [vmem:[%s91 + $0x48] sm:$0xff]
    %v102 = vld [vmem:[%s91 + $0x50] sm:$0xff]
    %v103 = vld [vmem:[%s91 + $0x58] sm:$0xff]
    %104 = vmatpush.msra.mxu0 %v32
    %105 = vmatpush.msra.mxu0 %v31
    %106 = vmatpush.msra.mxu0 %v30
    %107 = vmatpush.msra.mxu0 %v29
    %108 = vmatpush.msra.mxu0 %v28
    %109 = vmatpush.msra.mxu0 %v27
    %110 = vmatpush.msra.mxu0 %v26
    %111 = vmatpush.msra.mxu0 %v25
    %112 = vmatpush.msra.mxu0 %v24
    %113 = vmatpush.msra.mxu0 %v23
    %114 = vmatpush.msra.mxu0 %v22
    %115 = vmatpush.msra.mxu0 %v21
    %116 = vmatpush.msra.mxu0 %v20
    %117 = vmatpush.msra.mxu0 %v19
    %118 = vmatpush.msra.mxu0 %v18
    %119 = vmatpush.msra.mxu0 %v17
    %120 = vmatmul.f32.gmra.mxu0 %v92
    %v121 = vpop.f32.mrf.mxu0
    %v122 = vadd.f32 0.0, %v121
    %123 = vmatmul.f32.gmra.mxu0 %v96
    %v124 = vpop.f32.mrf.mxu0
    %v125 = vadd.f32 0.0, %v124
    %126 = vmatmul.f32.gmra.mxu0 %v100
    %v127 = vpop.f32.mrf.mxu0
    %v128 = vadd.f32 0.0, %v127
    %129 = vdwg.mxu0
    %130 = vmatpush.msra.mxu0 %v48
    %131 = vmatpush.msra.mxu0 %v47
    %132 = vmatpush.msra.mxu0 %v46
    %133 = vmatpush.msra.mxu0 %v45
    %134 = vmatpush.msra.mxu0 %v44
    %135 = vmatpush.msra.mxu0 %v43
    %136 = vmatpush.msra.mxu0 %v42
    %137 = vmatpush.msra.mxu0 %v41
    %138 = vmatpush.msra.mxu0 %v40
    %139 = vmatpush.msra.mxu0 %v39
    %140 = vmatpush.msra.mxu0 %v38
    %141 = vmatpush.msra.mxu0 %v37
    %142 = vmatpush.msra.mxu0 %v36
    %143 = vmatpush.msra.mxu0 %v35
    %144 = vmatpush.msra.mxu0 %v34
    %145 = vmatpush.msra.mxu0 %v33
    %146 = vmatmul.f32.gmra.mxu0 %v93
    %v147 = vpop.f32.mrf.mxu0
    %v148 = vadd.f32 %v122, %v147
    %149 = vmatmul.f32.gmra.mxu0 %v97
    %v150 = vpop.f32.mrf.mxu0
    %v151 = vadd.f32 %v125, %v150
    %152 = vmatmul.f32.gmra.mxu0 %v101
    %v153 = vpop.f32.mrf.mxu0
    %v154 = vadd.f32 %v128, %v153
    %155 = vdwg.mxu0
    %156 = vmatpush.msra.mxu0 %v64
    %157 = vmatpush.msra.mxu0 %v63
    %158 = vmatpush.msra.mxu0 %v62
    %159 = vmatpush.msra.mxu0 %v61
    %160 = vmatpush.msra.mxu0 %v60
    %161 = vmatpush.msra.mxu0 %v59
    %162 = vmatpush.msra.mxu0 %v58
    %163 = vmatpush.msra.mxu0 %v57
    %164 = vmatpush.msra.mxu0 %v56
    %165 = vmatpush.msra.mxu0 %v55
    %166 = vmatpush.msra.mxu0 %v54
    %167 = vmatpush.msra.mxu0 %v53
    %168 = vmatpush.msra.mxu0 %v52
    %169 = vmatpush.msra.mxu0 %v51
    %170 = vmatpush.msra.mxu0 %v50
    %171 = vmatpush.msra.mxu0 %v49
    %172 = vmatmul.f32.gmra.mxu0 %v94
    %v173 = vpop.f32.mrf.mxu0
    %v174 = vadd.f32 %v148, %v173
    %175 = vmatmul.f32.gmra.mxu0 %v98
    %v176 = vpop.f32.mrf.mxu0
    %v177 = vadd.f32 %v151, %v176
    %178 = vmatmul.f32.gmra.mxu0 %v102
    %v179 = vpop.f32.mrf.mxu0
    %v180 = vadd.f32 %v154, %v179
    %181 = vdwg.mxu0
    %182 = vmatpush.msra.mxu0 %v80
    %183 = vmatpush.msra.mxu0 %v79
    %184 = vmatpush.msra.mxu0 %v78
    %185 = vmatpush.msra.mxu0 %v77
    %186 = vmatpush.msra.mxu0 %v76
    %187 = vmatpush.msra.mxu0 %v75
    %188 = vmatpush.msra.mxu0 %v74
    %189 = vmatpush.msra.mxu0 %v73
    %190 = vmatpush.msra.mxu0 %v72
    %191 = vmatpush.msra.mxu0 %v71
    %192 = vmatpush.msra.mxu0 %v70
    %193 = vmatpush.msra.mxu0 %v69
    %194 = vmatpush.msra.mxu0 %v68
    %195 = vmatpush.msra.mxu0 %v67
    %196 = vmatpush.msra.mxu0 %v66
    %197 = vmatpush.msra.mxu0 %v65
    %198 = vmatmul.f32.gmra.mxu0 %v95
    %v199 = vpop.f32.mrf.mxu0
    %v200 = vadd.f32 %v174, %v199
    %201 = vmatmul.f32.gmra.mxu0 %v99
    %v202 = vpop.f32.mrf.mxu0
    %v203 = vadd.f32 %v177, %v202
    %204 = vmatmul.f32.gmra.mxu0 %v103
    %v205 = vpop.f32.mrf.mxu0
    %v206 = vadd.f32 %v180, %v205
    %207 = vdwg.mxu0
    %vm208 = vcmask 130048
    %209 = vst.msk [vmem:[%s3] sm:$0xff] %vm208, %v200
    %210 = vst.msk [vmem:[%s3 + $0x8] sm:$0xff] %vm208, %v203
    %211 = vst.msk [vmem:[%s3 + $0x10] sm:$0xff] %vm208, %v206
    %v213 = vsel %vm208, %v200, 0
    %v216 = vsel %vm208, %v203, 0
    %v219 = vsel %vm208, %v206, 0
    %221 = vmatpush.msra.mxu0 0.0
    %222 = vmatpush.msra.mxu0 0.0
    %223 = vmatpush.msra.mxu0 0.0
    %224 = vmatpush.msra.mxu0 0.0
    %225 = vmatpush.msra.mxu0 0.0
    %226 = vmatpush.msra.mxu0 0.0
    %227 = vmatpush.msra.mxu0 0.0
    %228 = vmatpush.msra.mxu0 0.0
    %229 = vmatpush.msra.mxu0 0.0
    %230 = vmatpush.msra.mxu0 0.0
    %231 = vmatpush.msra.mxu0 0.0
    %232 = vmatpush.msra.mxu0 0.0
    %233 = vmatpush.msra.mxu0 0.0
    %234 = vmatpush.msra.mxu0 0.0
    %235 = vmatpush.msra.mxu0 %v85
    %236 = vmatpush.msra.mxu0 %v81
    %237 = vmatmul.f32.gmra.mxu0 %v213
    %v238 = vpop.f32.mrf.mxu0
    %v239 = vadd.f32 0.0, %v238
    %240 = vmatmul.f32.gmra.mxu0 %v216
    %v241 = vpop.f32.mrf.mxu0
    %v242 = vadd.f32 0.0, %v241
    %243 = vmatmul.f32.gmra.mxu0 %v219
    %v244 = vpop.f32.mrf.mxu0
    %v245 = vadd.f32 0.0, %v244
    %246 = vdwg.mxu0
    %247 = vmatpush.msra.mxu0 0.0
    %248 = vmatpush.msra.mxu0 0.0
    %249 = vmatpush.msra.mxu0 0.0
    %250 = vmatpush.msra.mxu0 0.0
    %251 = vmatpush.msra.mxu0 0.0
    %252 = vmatpush.msra.mxu0 0.0
    %253 = vmatpush.msra.mxu0 0.0
    %254 = vmatpush.msra.mxu0 0.0
    %255 = vmatpush.msra.mxu0 0.0
    %256 = vmatpush.msra.mxu0 0.0
    %257 = vmatpush.msra.mxu0 0.0
    %258 = vmatpush.msra.mxu0 0.0
    %259 = vmatpush.msra.mxu0 0.0
    %260 = vmatpush.msra.mxu0 0.0
    %261 = vmatpush.msra.mxu0 %v86
    %262 = vmatpush.msra.mxu0 %v82
    %263 = vmatmul.f32.gmra.mxu0 %v213
    %v264 = vpop.f32.mrf.mxu0
    %v265 = vadd.f32 0.0, %v264
    %266 = vmatmul.f32.gmra.mxu0 %v216
    %v267 = vpop.f32.mrf.mxu0
    %v268 = vadd.f32 0.0, %v267
    %269 = vmatmul.f32.gmra.mxu0 %v219
    %v270 = vpop.f32.mrf.mxu0
    %v271 = vadd.f32 0.0, %v270
    %272 = vdwg.mxu0
    %273 = vmatpush.msra.mxu0 0.0
    %274 = vmatpush.msra.mxu0 0.0
    %275 = vmatpush.msra.mxu0 0.0
    %276 = vmatpush.msra.mxu0 0.0
    %277 = vmatpush.msra.mxu0 0.0
    %278 = vmatpush.msra.mxu0 0.0
    %279 = vmatpush.msra.mxu0 0.0
    %280 = vmatpush.msra.mxu0 0.0
    %281 = vmatpush.msra.mxu0 0.0
    %282 = vmatpush.msra.mxu0 0.0
    %283 = vmatpush.msra.mxu0 0.0
    %284 = vmatpush.msra.mxu0 0.0
    %285 = vmatpush.msra.mxu0 0.0
    %286 = vmatpush.msra.mxu0 0.0
    %287 = vmatpush.msra.mxu0 %v87
    %288 = vmatpush.msra.mxu0 %v83
    %289 = vmatmul.f32.gmra.mxu0 %v213
    %v290 = vpop.f32.mrf.mxu0
    %v291 = vadd.f32 0.0, %v290
    %292 = vmatmul.f32.gmra.mxu0 %v216
    %v293 = vpop.f32.mrf.mxu0
    %v294 = vadd.f32 0.0, %v293
    %295 = vmatmul.f32.gmra.mxu0 %v219
    %v296 = vpop.f32.mrf.mxu0
    %v297 = vadd.f32 0.0, %v296
    %298 = vdwg.mxu0
    %299 = vmatpush.msra.mxu0 0.0
    %300 = vmatpush.msra.mxu0 0.0
    %301 = vmatpush.msra.mxu0 0.0
    %302 = vmatpush.msra.mxu0 0.0
    %303 = vmatpush.msra.mxu0 0.0
    %304 = vmatpush.msra.mxu0 0.0
    %305 = vmatpush.msra.mxu0 0.0
    %306 = vmatpush.msra.mxu0 0.0
    %307 = vmatpush.msra.mxu0 0.0
    %308 = vmatpush.msra.mxu0 0.0
    %309 = vmatpush.msra.mxu0 0.0
    %310 = vmatpush.msra.mxu0 0.0
    %311 = vmatpush.msra.mxu0 0.0
    %312 = vmatpush.msra.mxu0 0.0
    %313 = vmatpush.msra.mxu0 %v88
    %314 = vmatpush.msra.mxu0 %v84
    %315 = vmatmul.f32.gmra.mxu0 %v213
    %v316 = vpop.f32.mrf.mxu0
    %v317 = vadd.f32 0.0, %v316
    %318 = vmatmul.f32.gmra.mxu0 %v216
    %v319 = vpop.f32.mrf.mxu0
    %v320 = vadd.f32 0.0, %v319
    %321 = vmatmul.f32.gmra.mxu0 %v219
    %v322 = vpop.f32.mrf.mxu0
    %v323 = vadd.f32 0.0, %v322
    %324 = vdwg.mxu0
    %s325 = smul.addr %s89, 8
    %s326 = scalar_lea.vmem [#allocation2], %s325
    %327 = vst [vmem:[%s326] sm:$0xff] %v239
    %328 = vst [vmem:[%s326 + $0x8] sm:$0xff] %v265
    %329 = vst [vmem:[%s326 + $0x10] sm:$0xff] %v291
    %330 = vst [vmem:[%s326 + $0x18] sm:$0xff] %v317
    %331 = vst [vmem:[%s326 + $0x20] sm:$0xff] %v242
    %332 = vst [vmem:[%s326 + $0x28] sm:$0xff] %v268
    %333 = vst [vmem:[%s326 + $0x30] sm:$0xff] %v294
    %334 = vst [vmem:[%s326 + $0x38] sm:$0xff] %v320
    %335 = vst [vmem:[%s326 + $0x40] sm:$0xff] %v245
    %336 = vst [vmem:[%s326 + $0x48] sm:$0xff] %v271
    %337 = vst [vmem:[%s326 + $0x50] sm:$0xff] %v297
    %338 = vst [vmem:[%s326 + $0x58] sm:$0xff] %v323
    // Predicated region
    $region14: #{tpu_custom_call.1} parent=1 // pred_check
      _
    $region15: #{tpu_custom_call.1} parent=1 // pred_check_branch
      %340 = sbr.rel (0) target = $region17
    $region16: #{tpu_custom_call.1} parent=1 // pred_region
      _
    $region17: #{tpu_custom_call.1} parent=1 // pred_fallthru
      _
    // Predicated region
    $region18: #{tpu_custom_call.1} parent=1 // pred_check
      _
    $region19: #{tpu_custom_call.1} parent=1 // pred_check_branch
      %342 = sbr.rel (0) target = $region21
    $region20: #{tpu_custom_call.1} parent=1 // pred_region
      %344 = vsyncadd [#allocation3], 0
      %s345 = sshll.u32 [#allocation2], 4
      %s346 = int_to_ptr.vmem [resolvable:$true] %s345
      %s347 = sshll.u32 %s4, 4
      %s348 = int_to_ptr.hbm [resolvable:$true] %s347
      %353 = dma.vmem_to_hbm [thread:$0]  %s346, 1536, %s348, [#allocation3], 512, 512, 32
    $region21: #{tpu_custom_call.1} parent=1 // pred_fallthru
      _
    // Predicated region
    $region22: #{tpu_custom_call.1} parent=1 // pred_check
      _
    $region23: #{tpu_custom_call.1} parent=1 // pred_check_branch
      %355 = sbr.rel (0) target = $region25
    $region24: #{tpu_custom_call.1} parent=1 // pred_region
      _
    $region25: #{tpu_custom_call.1} parent=1 // pred_fallthru
      _
    // Predicated region
    $region26: #{tpu_custom_call.1} parent=1 // pred_check
      _
    $region27: #{tpu_custom_call.1} parent=1 // pred_check_branch
      %357 = sbr.rel (0) target = $region29
    $region28: #{tpu_custom_call.1} parent=1 // pred_region
      %359 = dma.done [#allocation3], 1536
    $region29: #{tpu_custom_call.1} parent=1 // pred_fallthru
      _
    %360 = vsyncpa [#allocation3], 1

</llo_original>
